<compile_context>
chip_gen: v7x
topology: tpu7x:2x2x1
jax: 0.10.0
libtpu: 0.0.40
codegen_flags: <defaults>
</compile_context>

<pallas_src>
import jax
import jax.numpy as jnp
from jax.experimental import pallas as pl
from jax.experimental.pallas import tpu as pltpu

HIDDEN = 256
DROPOUT_P = 0.2
_NEG_BIG = -1e30  # bias for padded logits: exp(-1e30 - m) == 0.0 in f32


def _mlp_body(x, mask, w1t, b1, w2t, b2, o_ref):
    # First linear: (TB, obs) @ (obs, HIDDEN) -> (TB, HIDDEN); f32 MXU accumulate.
    h = jnp.dot(x, w1t, preferred_element_type=jnp.float32) + b1
    if mask is not None:
        h = h * mask                      # inverted dropout; mask already / (1-p)
    h = jnp.maximum(h, 0.0)               # relu(dropout(l1(x)))
    # Second linear: (TB, HIDDEN) @ (HIDDEN, A_pad) -> (TB, A_pad)
    logits = jnp.dot(h, w2t, preferred_element_type=jnp.float32) + b2
    # Numerically-stable softmax; padded lanes carry bias -1e30 -> exp == 0.
    m = jnp.max(logits, axis=-1, keepdims=True)
    e = jnp.exp(logits - m)
    denom = jnp.sum(e, axis=-1, keepdims=True)
    o_ref[...] = (e * pl.reciprocal(denom, approx=False)).astype(o_ref.dtype)


def _eval_kernel(x_ref, w1_ref, b1_ref, w2_ref, b2_ref, o_ref):
    _mlp_body(x_ref[...], None, w1_ref[...], b1_ref[...], w2_ref[...],
              b2_ref[...], o_ref)


def _train_kernel(x_ref, mask_ref, w1_ref, b1_ref, w2_ref, b2_ref, o_ref):
    _mlp_body(x_ref[...], mask_ref[...], w1_ref[...], b1_ref[...], w2_ref[...],
              b2_ref[...], o_ref)


def _pick_batch_tile(batch, obs_dim, act_pad, hidden, has_mask):
    """Largest batch tile that (a) divides batch, (b) fits a conservative VMEM
    budget, and (c) leaves >= 2 grid steps when batch >= 16 (v7x megacore)."""
    budget = 6 * 1024 * 1024  # bytes; safe under v5e's 16 MiB scoped default

    def tile_bytes(tb):
        streamed = tb * obs_dim + tb * act_pad + (tb * hidden if has_mask else 0)
        resident = obs_dim * hidden + hidden + hidden * act_pad + act_pad
        temps = 4 * tb * hidden          # h / logits / e / compiler temporaries
        return 4 * (2 * streamed + 2 * resident + temps)  # double-buffered blocks

    cap = 512                            # ~512 already amortizes the ~0.35us/step
    if batch >= 16:
        cap = min(cap, batch // 2)       # >= 2 grid steps -> both v7x TensorCores
    for tb in (512, 256, 128, 64, 32, 16, 8):
        if tb <= cap and batch % tb == 0 and tile_bytes(tb) <= budget:
            return tb
    return batch                         # small / odd batch: one full-batch tile


def mlp_policy_forward(x, w1, b1, w2, b2, *, dropout_mask=None):
    """Forward pass of MLPPolicy.

    x:  (B, obs) f32
    w1: (HIDDEN, obs), b1: (HIDDEN,)   -- PyTorch nn.Linear (out, in) layout
    w2: (A, HIDDEN),   b2: (A,)
    dropout_mask: optional (B, HIDDEN) pre-scaled keep mask with values in
      {0, 1/(1-p)}; None -> eval mode (dropout = identity, as module.eval()).
    """
    batch, obs_dim = x.shape
    hidden = w1.shape[0]
    action_dim = w2.shape[0]
    act_pad = ((action_dim + 127) // 128) * 128

    # One-time layout prep (tiny): (K, N) MXU weight order + lane-dense padding.
    w1t = jnp.transpose(w1)                                     # (obs, HIDDEN)
    w2t = jnp.transpose(w2)                                     # (HIDDEN, A)
    if act_pad != action_dim:
        w2t = jnp.pad(w2t, ((0, 0), (0, act_pad - action_dim)))
        b2p = jnp.pad(b2.reshape(1, action_dim),
                      ((0, 0), (0, act_pad - action_dim)),
                      constant_values=_NEG_BIG)
    else:
        b2p = b2.reshape(1, action_dim)
    b1_2d = b1.reshape(1, hidden)

    training = dropout_mask is not None
    tb = _pick_batch_tile(batch, obs_dim, act_pad, hidden, training)
    grid = (batch // tb,)

    x_spec = pl.BlockSpec((tb, obs_dim), lambda i: (i, 0))
    mask_spec = pl.BlockSpec((tb, hidden), lambda i: (i, 0))
    # Resident operands: constant index maps -> stay in VMEM across the grid.
    # TODO(synk): pipeline_mode=pl.Buffered(1) on these would reclaim one weight
    # copy of VMEM; skipped here since the weights are only a few hundred KB.
    w1_spec = pl.BlockSpec((obs_dim, hidden), lambda i: (0, 0))
    b1_spec = pl.BlockSpec((1, hidden), lambda i: (0, 0))
    w2_spec = pl.BlockSpec((hidden, act_pad), lambda i: (0, 0))
    b2_spec = pl.BlockSpec((1, act_pad), lambda i: (0, 0))
    out_spec = pl.BlockSpec((tb, act_pad), lambda i: (i, 0))

    if training:
        kernel = _train_kernel
        in_specs = [x_spec, mask_spec, w1_spec, b1_spec, w2_spec, b2_spec]
        args = (x, dropout_mask.astype(x.dtype), w1t, b1_2d, w2t, b2p)
    else:
        kernel = _eval_kernel
        in_specs = [x_spec, w1_spec, b1_spec, w2_spec, b2_spec]
        args = (x, w1t, b1_2d, w2t, b2p)

    flops = 2 * batch * obs_dim * hidden + 2 * batch * hidden * act_pad
    transcendentals = batch * act_pad
    bytes_accessed = 4 * (x.size + w1t.size + b1_2d.size + w2t.size + b2p.size
                          + (dropout_mask.size if training else 0)
                          + batch * act_pad)

    out = pl.pallas_call(
        kernel,
        out_shape=jax.ShapeDtypeStruct((batch, act_pad), x.dtype),
        grid_spec=pltpu.PrefetchScalarGridSpec(
            num_scalar_prefetch=0,
            grid=grid,
            in_specs=in_specs,
            out_specs=out_spec,
        ),
        compiler_params=pltpu.CompilerParams(
            dimension_semantics=("parallel",),
        ),
        cost_estimate=pl.CostEstimate(
            flops=flops,
            transcendentals=transcendentals,
            bytes_accessed=bytes_accessed,
        ),
    )(*args)

    # Tiny wrapper-side slice keeps every in-kernel store lane-dense (128 lanes).
    return out[:, :action_dim] if act_pad != action_dim else out


if __name__ == "__main__":
    key = jax.random.PRNGKey(0)
    k_x, k_w1, k_b1, k_w2, k_b2, k_drop = jax.random.split(key, 6)

    batch = 8
    obs_dim = 32       # observation_space_dim
    action_dim = 16    # action_space_dim
    hidden = HIDDEN    # fixed at 256 by the module

    # nn.Linear-style init: U(-1/sqrt(fan_in), 1/sqrt(fan_in)), weight (out, in).
    bound1 = 1.0 / (obs_dim ** 0.5)
    w1 = jax.random.uniform(k_w1, (hidden, obs_dim), minval=-bound1, maxval=bound1,
                            dtype=jnp.float32)
    b1 = jax.random.uniform(k_b1, (hidden,), minval=-bound1, maxval=bound1,
                            dtype=jnp.float32)
    bound2 = 1.0 / (hidden ** 0.5)
    w2 = jax.random.uniform(k_w2, (action_dim, hidden), minval=-bound2, maxval=bound2,
                            dtype=jnp.float32)
    b2 = jax.random.uniform(k_b2, (action_dim,), minval=-bound2, maxval=bound2,
                            dtype=jnp.float32)
    x = jax.random.normal(k_x, (batch, obs_dim), dtype=jnp.float32)

    # --- Eval mode (dropout = identity), matches PyTorch module.eval() ---
    out = jax.block_until_ready(mlp_policy_forward(x, w1, b1, w2, b2))
    h_ref = jnp.maximum(x @ w1.T + b1, 0.0)
    ref = jax.nn.softmax(h_ref @ w2.T + b2, axis=-1)
    assert out.shape == (batch, action_dim)
    assert jnp.allclose(out, ref, atol=1e-5, rtol=1e-5)
    assert jnp.allclose(jnp.sum(out, axis=-1), 1.0, atol=1e-5)

    # --- Training mode: Bernoulli(keep=0.8) inverted-dropout mask from the
    #     wrapper (deterministic given the key), checked against a JAX reference.
    keep = jax.random.bernoulli(k_drop, 1.0 - DROPOUT_P, (batch, hidden))
    mask = keep.astype(jnp.float32) / (1.0 - DROPOUT_P)
    out_tr = jax.block_until_ready(
        mlp_policy_forward(x, w1, b1, w2, b2, dropout_mask=mask))
    h_tr = jnp.maximum((x @ w1.T + b1) * mask, 0.0)
    ref_tr = jax.nn.softmax(h_tr @ w2.T + b2, axis=-1)
    assert out_tr.shape == (batch, action_dim)
    assert jnp.allclose(out_tr, ref_tr, atol=1e-5, rtol=1e-5)
    assert jnp.allclose(jnp.sum(out_tr, axis=-1), 1.0, atol=1e-5)
    assert bool(jnp.all(jnp.isfinite(out_tr)))

    print("KERNEL_OK")
</pallas_src>

<mosaic_0001>
module attributes {stable_mosaic.version = 11 : i64} {
  func.func @_eval_kernel(%arg0: i32, %arg1: memref<8x32xf32, #tpu.memory_space<vmem>>, %arg2: memref<32x256xf32, #tpu.memory_space<vmem>>, %arg3: memref<1x256xf32, #tpu.memory_space<vmem>>, %arg4: memref<256x128xf32, #tpu.memory_space<vmem>>, %arg5: memref<1x128xf32, #tpu.memory_space<vmem>>, %arg6: memref<8x128xf32, #tpu.memory_space<vmem>>) attributes {dimension_semantics = [#tpu.dimension_semantics<parallel>], iteration_bounds = array<i64: 1>, scalar_prefetch = 0 : i64, scratch_operands = 0 : i64, tpu.core_type = #tpu.core_type<tc>, window_params = [{transform_indices = @transform_0, window_bounds = array<i64: 8, 32>}, {pipeline_mode = #tpu.pipeline_mode<synchronous>, transform_indices = @transform_1, window_bounds = array<i64: 32, 256>}, {pipeline_mode = #tpu.pipeline_mode<synchronous>, transform_indices = @transform_2, window_bounds = array<i64: 1, 256>}, {pipeline_mode = #tpu.pipeline_mode<synchronous>, transform_indices = @transform_3, window_bounds = array<i64: 256, 128>}, {pipeline_mode = #tpu.pipeline_mode<synchronous>, transform_indices = @transform_4, window_bounds = array<i64: 1, 128>}, {transform_indices = @transform_5, window_bounds = array<i64: 8, 128>}]} {
    %c0 = arith.constant 0 : index
    %c0_0 = arith.constant 0 : index
    %0 = vector.load %arg1[%c0, %c0_0] : memref<8x32xf32, #tpu.memory_space<vmem>>, vector<8x32xf32>
    %c0_1 = arith.constant 0 : index
    %c0_2 = arith.constant 0 : index
    %1 = vector.load %arg2[%c0_1, %c0_2] : memref<32x256xf32, #tpu.memory_space<vmem>>, vector<32x256xf32>
    %c0_3 = arith.constant 0 : index
    %c0_4 = arith.constant 0 : index
    %2 = vector.load %arg3[%c0_3, %c0_4] : memref<1x256xf32, #tpu.memory_space<vmem>>, vector<1x256xf32>
    %c0_5 = arith.constant 0 : index
    %c0_6 = arith.constant 0 : index
    %3 = vector.load %arg4[%c0_5, %c0_6] : memref<256x128xf32, #tpu.memory_space<vmem>>, vector<256x128xf32>
    %c0_7 = arith.constant 0 : index
    %c0_8 = arith.constant 0 : index
    %4 = vector.load %arg5[%c0_7, %c0_8] : memref<1x128xf32, #tpu.memory_space<vmem>>, vector<1x128xf32>
    %cst = arith.constant dense<0.000000e+00> : vector<8x256xf32>
    %5 = tpu.matmul %0, %1, %cst {dimension_numbers = #tpu.dot_dimension_numbers<[1], [0], [0], [1], [0, 0, 1, 1], [], []>} : vector<8x32xf32>, vector<32x256xf32>, vector<8x256xf32> -> vector<8x256xf32>
    %6 = vector.broadcast %2 : vector<1x256xf32> to vector<8x256xf32>
    %7 = arith.addf %5, %6 : vector<8x256xf32>
    %cst_9 = arith.constant 0.000000e+00 : f32
    %8 = vector.broadcast %cst_9 : f32 to vector<8x256xf32>
    %9 = arith.maximumf %7, %8 : vector<8x256xf32>
    %cst_10 = arith.constant dense<0.000000e+00> : vector<8x128xf32>
    %10 = tpu.matmul %9, %3, %cst_10 {dimension_numbers = #tpu.dot_dimension_numbers<[1], [0], [0], [1], [0, 0, 1, 1], [], []>} : vector<8x256xf32>, vector<256x128xf32>, vector<8x128xf32> -> vector<8x128xf32>
    %11 = vector.broadcast %4 : vector<1x128xf32> to vector<8x128xf32>
    %12 = arith.addf %10, %11 : vector<8x128xf32>
    %cst_11 = arith.constant dense<0xFF800000> : vector<8xf32>
    %13 = vector.multi_reduction <maximumf>, %12, %cst_11 [1] : vector<8x128xf32> to vector<8xf32>
    %14 = vector.shape_cast %13 : vector<8xf32> to vector<8x1xf32>
    %15 = vector.broadcast %14 : vector<8x1xf32> to vector<8x128xf32>
    %16 = arith.subf %12, %15 : vector<8x128xf32>
    %17 = math.exp %16 : vector<8x128xf32>
    %cst_12 = arith.constant dense<0.000000e+00> : vector<8xf32>
    %18 = vector.multi_reduction <add>, %17, %cst_12 [1] : vector<8x128xf32> to vector<8xf32>
    %19 = vector.shape_cast %18 : vector<8xf32> to vector<8x1xf32>
    %20 = tpu.reciprocal %19 : vector<8x1xf32> -> vector<8x1xf32>
    %21 = vector.broadcast %20 : vector<8x1xf32> to vector<8x128xf32>
    %22 = arith.mulf %17, %21 : vector<8x128xf32>
    %c0_13 = arith.constant 0 : index
    %c0_14 = arith.constant 0 : index
    %23 = vector.load %arg6[%c0_13, %c0_14] : memref<8x128xf32, #tpu.memory_space<vmem>>, vector<8x128xf32>
    tpu.vector_store %arg6[%c0_13, %c0_14], %22 {strides = array<i32>} : memref<8x128xf32, #tpu.memory_space<vmem>>, vector<8x128xf32>,
    return
  }
  func.func @transform_0(%arg0: i32) -> (i32, i32) {
    %c0_i32 = arith.constant 0 : i32
    %c0_i32_0 = arith.constant 0 : i32
    return %arg0, %c0_i32 : i32, i32
  }
  func.func @transform_1(%arg0: i32) -> (i32, i32) {
    %c0_i32 = arith.constant 0 : i32
    %c0_i32_0 = arith.constant 0 : i32
    %c0_i32_1 = arith.constant 0 : i32
    return %c0_i32, %c0_i32_0 : i32, i32
  }
  func.func @transform_2(%arg0: i32) -> (i32, i32) {
    %c0_i32 = arith.constant 0 : i32
    %c0_i32_0 = arith.constant 0 : i32
    %c0_i32_1 = arith.constant 0 : i32
    return %c0_i32, %c0_i32_0 : i32, i32
  }
  func.func @transform_3(%arg0: i32) -> (i32, i32) {
    %c0_i32 = arith.constant 0 : i32
    %c0_i32_0 = arith.constant 0 : i32
    %c0_i32_1 = arith.constant 0 : i32
    return %c0_i32, %c0_i32_0 : i32, i32
  }
  func.func @transform_4(%arg0: i32) -> (i32, i32) {
    %c0_i32 = arith.constant 0 : i32
    %c0_i32_0 = arith.constant 0 : i32
    %c0_i32_1 = arith.constant 0 : i32
    return %c0_i32, %c0_i32_0 : i32, i32
  }
  func.func @transform_5(%arg0: i32) -> (i32, i32) {
    %c0_i32 = arith.constant 0 : i32
    %c0_i32_0 = arith.constant 0 : i32
    return %arg0, %c0_i32 : i32, i32
  }
}

</mosaic_0001>

<llo_original>
// kernel: tpu_custom_call.1
$region0: #{tpu_custom_call.1}
  #allocation0 [shape = 'u32[]', space=smem, size = 0x4, offset = 0x4, fixed_abs, tag = 'smem constant byte address 0x4 - core index']
  #allocation1 [shape = 'u32[144,128]{1,0:T(1,128)}', space=vmem, size = 0x12000, scoped, tag = 'internal scratch']
  %s0 = inlined_call_operand.hbm [shape: f32[8,32], index: 0, kind: input, shape index: {}]
  %s1 = inlined_call_operand.hbm [shape: f32[32,256], index: 1, kind: input, shape index: {}]
  %s2 = inlined_call_operand.vmem [shape: f32[1,256], index: 2, kind: input, shape index: {}]
  %s3 = inlined_call_operand.hbm [shape: f32[256,128], index: 3, kind: input, shape index: {}]
  %s4 = inlined_call_operand.vmem [shape: f32[1,128], index: 4, kind: input, shape index: {}]
  %s5 = inlined_call_operand.hbm [shape: f32[8,128], index: 5, kind: output, shape index: {}]
  %s6 = sld [smem:[#allocation0]]
  $region42: #{tpu_custom_call.1} parent=0
    _
  %s8 = ssub.s32 1, %s6
  %s9 = scalar_select 0, %s8, %s6
  $region1: #{tpu_custom_call.1} parent=0
    #allocation2 [shape = 'u8[4096]{0}', space=vmem, size = 0x1000, scoped, tag = 'input window, operand 0, single buffered']
    #allocation3 [shape = 's32[1]{0}', space=sflag, size = 0x4, scoped, tag = 'scoped memory for tpu_custom_call.1']
    #allocation4 [shape = 's32[1]{0}', space=sflag, size = 0x4, scoped, tag = 'scoped memory for tpu_custom_call.1']
    #allocation5 [shape = 'u8[32768]{0}', space=vmem, size = 0x8000, scoped, tag = 'input window, operand 1, single buffered']
    #allocation6 [shape = 's32[1]{0}', space=sflag, size = 0x4, scoped, tag = 'scoped memory for tpu_custom_call.1']
    #allocation7 [shape = 'u8[131072]{0}', space=vmem, size = 0x20000, scoped, tag = 'input window, operand 3, single buffered']
    #allocation8 [shape = 'u8[4096]{0}', space=vmem, size = 0x1000, scoped, tag = 'output window, operand 0, single buffered']
    %10 = vsyncpa [#allocation3], 0
    %11 = vsyncpa [#allocation6], 0
    %12 = vsyncpa [#allocation4], 0
    // Predicated region
    $region2: #{tpu_custom_call.1} parent=1 // pred_check
      _
    $region3: #{tpu_custom_call.1} parent=1 // pred_check_branch
      %14 = sbr.rel (0) target = $region5
    $region4: #{tpu_custom_call.1} parent=1 // pred_region
      %s16 = ssub.s32 128, 128
      %17 = vsyncadd [#allocation3], %s16
      %s19 = sshll.u32 [#allocation2], 4
      %s20 = int_to_ptr.vmem [resolvable:$true] %s19
      %22 = dma.hbm_to_vmem [thread:$0]  %s0, 128, %s20, [#allocation3]
    $region5: #{tpu_custom_call.1} parent=1 // pred_fallthru
      _
    // Predicated region
    $region6: #{tpu_custom_call.1} parent=1 // pred_check
      _
    $region7: #{tpu_custom_call.1} parent=1 // pred_check_branch
      %24 = sbr.rel (0) target = $region9
    $region8: #{tpu_custom_call.1} parent=1 // pred_region
      %s26 = ssub.s32 1024, 1024
      %27 = vsyncadd [#allocation6], %s26
      %s28 = sshll.u32 [#allocation5], 4
      %s29 = int_to_ptr.vmem [resolvable:$true] %s28
      %34 = dma.hbm_to_vmem [thread:$0]  %s1, 1024, %s29, [#allocation6], 256, 256, 16
    $region9: #{tpu_custom_call.1} parent=1 // pred_fallthru
      _
    // Predicated region
    $region10: #{tpu_custom_call.1} parent=1 // pred_check
      _
    $region11: #{tpu_custom_call.1} parent=1 // pred_check_branch
      %36 = sbr.rel (0) target = $region13
    $region12: #{tpu_custom_call.1} parent=1 // pred_region
      _
    $region13: #{tpu_custom_call.1} parent=1 // pred_fallthru
      _
    // Predicated region
    $region14: #{tpu_custom_call.1} parent=1 // pred_check
      _
    $region15: #{tpu_custom_call.1} parent=1 // pred_check_branch
      %38 = sbr.rel (0) target = $region17
    $region16: #{tpu_custom_call.1} parent=1 // pred_region
      %s40 = ssub.s32 4096, 4096
      %41 = vsyncadd [#allocation6], %s40
      %s42 = sshll.u32 [#allocation7], 4
      %s43 = int_to_ptr.vmem [resolvable:$true] %s42
      %48 = dma.hbm_to_vmem [thread:$0]  %s3, 4096, %s43, [#allocation6], 128, 128, 8
    $region17: #{tpu_custom_call.1} parent=1 // pred_fallthru
      _
    // Predicated region
    $region18: #{tpu_custom_call.1} parent=1 // pred_check
      _
    $region19: #{tpu_custom_call.1} parent=1 // pred_check_branch
      %50 = sbr.rel (0) target = $region21
    $region20: #{tpu_custom_call.1} parent=1 // pred_region
      _
    $region21: #{tpu_custom_call.1} parent=1 // pred_fallthru
      _
    // Predicated region
    $region22: #{tpu_custom_call.1} parent=1 // pred_check
      _
    $region23: #{tpu_custom_call.1} parent=1 // pred_check_branch
      %52 = sbr.rel (0) target = $region25
    $region24: #{tpu_custom_call.1} parent=1 // pred_region
      %53 = dma.done [#allocation3], 128
    $region25: #{tpu_custom_call.1} parent=1 // pred_fallthru
      _
    // Predicated region
    $region26: #{tpu_custom_call.1} parent=1 // pred_check
      _
    $region27: #{tpu_custom_call.1} parent=1 // pred_check_branch
      %55 = sbr.rel (0) target = $region29
    $region28: #{tpu_custom_call.1} parent=1 // pred_region
      %56 = dma.done [#allocation6], 1024
    $region29: #{tpu_custom_call.1} parent=1 // pred_fallthru
      _
    // Predicated region
    $region30: #{tpu_custom_call.1} parent=1 // pred_check
      _
    $region31: #{tpu_custom_call.1} parent=1 // pred_check_branch
      %58 = sbr.rel (0) target = $region33
    $region32: #{tpu_custom_call.1} parent=1 // pred_region
      %59 = dma.done [#allocation6], 4096
    $region33: #{tpu_custom_call.1} parent=1 // pred_fallthru
      _
    %v60 = vld [vmem:[#allocation2] sm:$0xff]
    %v61 = vld [vmem:[#allocation5] sm:$0xff]
    %v62 = vld [vmem:[#allocation5 + $0x8] sm:$0xff]
    %v63 = vld [vmem:[#allocation5 + $0x10] sm:$0xff]
    %v64 = vld [vmem:[#allocation5 + $0x18] sm:$0xff]
    %v65 = vld [vmem:[#allocation5 + $0x20] sm:$0xff]
    %v66 = vld [vmem:[#allocation5 + $0x28] sm:$0xff]
    %v67 = vld [vmem:[#allocation5 + $0x30] sm:$0xff]
    %v68 = vld [vmem:[#allocation5 + $0x38] sm:$0xff]
    %v69 = vld [vmem:[%s2] sm:$0x3]
    %v70 = vld [vmem:[#allocation7] sm:$0xff]
    %v71 = vld [vmem:[#allocation7 + $0x8] sm:$0xff]
    %v72 = vld [vmem:[#allocation7 + $0x10] sm:$0xff]
    %v73 = vld [vmem:[#allocation7 + $0x18] sm:$0xff]
    %v74 = vld [vmem:[#allocation7 + $0x20] sm:$0xff]
    %v75 = vld [vmem:[#allocation7 + $0x28] sm:$0xff]
    %v76 = vld [vmem:[#allocation7 + $0x30] sm:$0xff]
    %v77 = vld [vmem:[#allocation7 + $0x38] sm:$0xff]
    %v78 = vld [vmem:[#allocation7 + $0x40] sm:$0xff]
    %v79 = vld [vmem:[#allocation7 + $0x48] sm:$0xff]
    %v80 = vld [vmem:[#allocation7 + $0x50] sm:$0xff]
    %v81 = vld [vmem:[#allocation7 + $0x58] sm:$0xff]
    %v82 = vld [vmem:[#allocation7 + $0x60] sm:$0xff]
    %v83 = vld [vmem:[#allocation7 + $0x68] sm:$0xff]
    %v84 = vld [vmem:[#allocation7 + $0x70] sm:$0xff]
    %v85 = vld [vmem:[#allocation7 + $0x78] sm:$0xff]
    %v86 = vld [vmem:[#allocation7 + $0x80] sm:$0xff]
    %v87 = vld [vmem:[#allocation7 + $0x88] sm:$0xff]
    %v88 = vld [vmem:[#allocation7 + $0x90] sm:$0xff]
    %v89 = vld [vmem:[#allocation7 + $0x98] sm:$0xff]
    %v90 = vld [vmem:[#allocation7 + $0xa0] sm:$0xff]
    %v91 = vld [vmem:[#allocation7 + $0xa8] sm:$0xff]
    %v92 = vld [vmem:[#allocation7 + $0xb0] sm:$0xff]
    %v93 = vld [vmem:[#allocation7 + $0xb8] sm:$0xff]
    %v94 = vld [vmem:[#allocation7 + $0xc0] sm:$0xff]
    %v95 = vld [vmem:[#allocation7 + $0xc8] sm:$0xff]
    %v96 = vld [vmem:[#allocation7 + $0xd0] sm:$0xff]
    %v97 = vld [vmem:[#allocation7 + $0xd8] sm:$0xff]
    %v98 = vld [vmem:[#allocation7 + $0xe0] sm:$0xff]
    %v99 = vld [vmem:[#allocation7 + $0xe8] sm:$0xff]
    %v100 = vld [vmem:[#allocation7 + $0xf0] sm:$0xff]
    %v101 = vld [vmem:[#allocation7 + $0xf8] sm:$0xff]
    %v102 = vld [vmem:[%s4] sm:$0x1]
    %v104 = vlaneseq
    %v105 = vshrl.u32 %v104, 7
    %v106 = vsub.s32 0, %v105
    %v107 = vrot.slane %v69, %v106
    %v108 = vlaneseq
    %v109 = vshrl.u32 %v108, 7
    %v110 = vsub.s32 1, %v109
    %v111 = vrot.slane %v69, %v110
    %vm114 = vcmask 261120
    %v116 = vsel %vm114, %v60, 0
    %118 = vmatprep.subr.mxu0 %v62
    %119 = vmatpush1.msra.mxu0 %v61
    %120 = vmatprep.subr.mxu0 %v64
    %121 = vmatpush1.msra.mxu0 %v63
    %122 = vmatprep.subr.mxu0 %v66
    %123 = vmatpush1.msra.mxu0 %v65
    %124 = vmatprep.subr.mxu0 %v68
    %125 = vmatpush1.msra.mxu0 %v67
    %126 = vmatprep.subr.mxu0 0.0
    %127 = vmatpush1.msra.mxu0 0.0
    %128 = vmatprep.subr.mxu0 0.0
    %129 = vmatpush1.msra.mxu0 0.0
    %130 = vmatprep.subr.mxu0 0.0
    %131 = vmatpush1.msra.mxu0 0.0
    %132 = vmatprep.subr.mxu0 0.0
    %133 = vmatpush1.msra.mxu0 0.0
    %134 = vmatprep.subr.mxu0 0.0
    %135 = vmatpush1.msra.mxu0 0.0
    %136 = vmatprep.subr.mxu0 0.0
    %137 = vmatpush1.msra.mxu0 0.0
    %138 = vmatprep.subr.mxu0 0.0
    %139 = vmatpush1.msra.mxu0 0.0
    %140 = vmatprep.subr.mxu0 0.0
    %141 = vmatpush1.msra.mxu0 0.0
    %142 = vmatprep.subr.mxu0 0.0
    %143 = vmatpush1.msra.mxu0 0.0
    %144 = vmatprep.subr.mxu0 0.0
    %145 = vmatpush1.msra.mxu0 0.0
    %146 = vmatprep.subr.mxu0 0.0
    %147 = vmatpush1.msra.mxu0 0.0
    %148 = vmatprep.subr.mxu0 0.0
    %149 = vmatpush1.msra.mxu0 0.0
    %150 = vmatprep.subr.mxu0 0.0
    %151 = vmatpush1.msra.mxu0 0.0
    %152 = vmatprep.subr.mxu0 0.0
    %153 = vmatpush1.msra.mxu0 0.0
    %154 = vmatprep.subr.mxu0 0.0
    %155 = vmatpush1.msra.mxu0 0.0
    %156 = vmatprep.subr.mxu0 0.0
    %157 = vmatpush1.msra.mxu0 0.0
    %158 = vmatprep.subr.mxu0 0.0
    %159 = vmatpush1.msra.mxu0 0.0
    %160 = vmatprep.subr.mxu0 0.0
    %161 = vmatpush1.msra.mxu0 0.0
    %162 = vmatprep.subr.mxu0 0.0
    %163 = vmatpush1.msra.mxu0 0.0
    %164 = vmatprep.subr.mxu0 0.0
    %165 = vmatpush1.msra.mxu0 0.0
    %166 = vmatprep.subr.mxu0 0.0
    %167 = vmatpush1.msra.mxu0 0.0
    %168 = vmatprep.subr.mxu0 0.0
    %169 = vmatpush1.msra.mxu0 0.0
    %170 = vmatprep.subr.mxu0 0.0
    %171 = vmatpush1.msra.mxu0 0.0
    %172 = vmatprep.subr.mxu0 0.0
    %173 = vmatpush1.msra.mxu0 0.0
    %174 = vmatprep.subr.mxu0 0.0
    %175 = vmatpush1.msra.mxu0 0.0
    %176 = vmatprep.subr.mxu0 0.0
    %177 = vmatpush1.msra.mxu0 0.0
    %178 = vmatprep.subr.mxu0 0.0
    %179 = vmatpush1.msra.mxu0 0.0
    %180 = vmatprep.subr.mxu0 0.0
    %181 = vmatpush1.msra.mxu0 0.0
    %182 = vmatprep.mubr.f32.mxu0 0.0
    %183 = vmatmul.mubr.f32.gmra.mrb[0].mxu0 %v116
    %v184 = vpop.f32.mrb[0].mxu0
    %v185 = vadd.f32 %v107, %v184
    %v186 = vpop.f32.mrb[0].mxu0
    %v187 = vadd.f32 %v111, %v186
    %188 = vdwg.mxu0
    %v189 = vmax.f32 %v185, 0.0
    %v190 = vmax.f32 %v187, 0.0
    %v192 = vlaneseq
    %v193 = vshrl.u32 %v192, 7
    %v194 = vsub.s32 0, %v193
    %v195 = vrot.slane %v102, %v194
    %197 = vmatprep.subr.mxu0 0.0
    %198 = vmatpush1.msra.mxu0 %v70
    %199 = vmatprep.subr.mxu0 0.0
    %200 = vmatpush1.msra.mxu0 %v71
    %201 = vmatprep.subr.mxu0 0.0
    %202 = vmatpush1.msra.mxu0 %v72
    %203 = vmatprep.subr.mxu0 0.0
    %204 = vmatpush1.msra.mxu0 %v73
    %205 = vmatprep.subr.mxu0 0.0
    %206 = vmatpush1.msra.mxu0 %v74
    %207 = vmatprep.subr.mxu0 0.0
    %208 = vmatpush1.msra.mxu0 %v75
    %209 = vmatprep.subr.mxu0 0.0
    %210 = vmatpush1.msra.mxu0 %v76
    %211 = vmatprep.subr.mxu0 0.0
    %212 = vmatpush1.msra.mxu0 %v77
    %213 = vmatprep.subr.mxu0 0.0
    %214 = vmatpush1.msra.mxu0 %v78
    %215 = vmatprep.subr.mxu0 0.0
    %216 = vmatpush1.msra.mxu0 %v79
    %217 = vmatprep.subr.mxu0 0.0
    %218 = vmatpush1.msra.mxu0 %v80
    %219 = vmatprep.subr.mxu0 0.0
    %220 = vmatpush1.msra.mxu0 %v81
    %221 = vmatprep.subr.mxu0 0.0
    %222 = vmatpush1.msra.mxu0 %v82
    %223 = vmatprep.subr.mxu0 0.0
    %224 = vmatpush1.msra.mxu0 %v83
    %225 = vmatprep.subr.mxu0 0.0
    %226 = vmatpush1.msra.mxu0 %v84
    %227 = vmatprep.subr.mxu0 0.0
    %228 = vmatpush1.msra.mxu0 %v85
    %229 = vmatprep.subr.mxu0 0.0
    %230 = vmatpush1.msra.mxu0 %v86
    %231 = vmatprep.subr.mxu0 0.0
    %232 = vmatpush1.msra.mxu0 %v87
    %233 = vmatprep.subr.mxu0 0.0
    %234 = vmatpush1.msra.mxu0 %v88
    %235 = vmatprep.subr.mxu0 0.0
    %236 = vmatpush1.msra.mxu0 %v89
    %237 = vmatprep.subr.mxu0 0.0
    %238 = vmatpush1.msra.mxu0 %v90
    %239 = vmatprep.subr.mxu0 0.0
    %240 = vmatpush1.msra.mxu0 %v91
    %241 = vmatprep.subr.mxu0 0.0
    %242 = vmatpush1.msra.mxu0 %v92
    %243 = vmatprep.subr.mxu0 0.0
    %244 = vmatpush1.msra.mxu0 %v93
    %245 = vmatprep.subr.mxu0 0.0
    %246 = vmatpush1.msra.mxu0 %v94
    %247 = vmatprep.subr.mxu0 0.0
    %248 = vmatpush1.msra.mxu0 %v95
    %249 = vmatprep.subr.mxu0 0.0
    %250 = vmatpush1.msra.mxu0 %v96
    %251 = vmatprep.subr.mxu0 0.0
    %252 = vmatpush1.msra.mxu0 %v97
    %253 = vmatprep.subr.mxu0 0.0
    %254 = vmatpush1.msra.mxu0 %v98
    %255 = vmatprep.subr.mxu0 0.0
    %256 = vmatpush1.msra.mxu0 %v99
    %257 = vmatprep.subr.mxu0 0.0
    %258 = vmatpush1.msra.mxu0 %v100
    %259 = vmatprep.subr.mxu0 0.0
    %260 = vmatpush1.msra.mxu0 %v101
    %261 = vmatprep.mubr.f32.mxu0 %v190
    %262 = vmatmul.mubr.f32.gmra.mrb[0].mxu0 %v189
    %v263 = vpop.f32.mrb[0].mxu0
    %v264 = vadd.f32 %v195, %v263
    %v265 = vpop.f32.mrb[0].mxu0
    %266 = vdwg.mxu0
    %267 = vmax.xlane.f32.xlu0 %v264
    %v268 = vpop.xlane.xlu0 %267
    %v269 = vsub.f32 %v264, %v268
    %v270 = vmul.f32 %v269, 1.442695
    %v271 = vpow.pop %v270
    %272 = vadd.xlane.f32.xlu0 %v271
    %v273 = vpop.xlane.xlu0 %272
    %v274 = vrcp.pop %v273
    %v275 = vmul.f32 %v271, %v274
    %276 = vst [vmem:[#allocation8] sm:$0xff] %v275
    // Predicated region
    $region34: #{tpu_custom_call.1} parent=1 // pred_check
      _
    $region35: #{tpu_custom_call.1} parent=1 // pred_check_branch
      %278 = sbr.rel (0) target = $region37
    $region36: #{tpu_custom_call.1} parent=1 // pred_region
      %s280 = ssub.s32 128, 128
      %281 = vsyncadd [#allocation4], %s280
      %s283 = sshll.u32 [#allocation8], 4
      %s284 = int_to_ptr.vmem [resolvable:$true] %s283
      %286 = dma.vmem_to_hbm [thread:$0]  %s284, 128, %s5, [#allocation4]
    $region37: #{tpu_custom_call.1} parent=1 // pred_fallthru
      _
    // Predicated region
    $region38: #{tpu_custom_call.1} parent=1 // pred_check
      _
    $region39: #{tpu_custom_call.1} parent=1 // pred_check_branch
      %288 = sbr.rel (0) target = $region41
    $region40: #{tpu_custom_call.1} parent=1 // pred_region
      %289 = dma.done [#allocation4], 128
    $region41: #{tpu_custom_call.1} parent=1 // pred_fallthru
      _
    %290 = vsyncpa [#allocation3], 1
    %291 = vsyncpa [#allocation6], 1
    %292 = vsyncpa [#allocation4], 1

</llo_original>
